<compile_context>
chip_gen: v5e
topology: v5e:2x2
jax: 0.10.0
libtpu: 0.0.40
codegen_flags: <defaults>
</compile_context>

<pallas_src>
import jax
import jax.numpy as jnp
from jax.experimental import pallas as pl
from jax.experimental.pallas import tpu as pltpu

_LANES = 128
_MAX_BLOCK_ROWS = 2048   # (2048, 128) f32 = 1 MiB per input tile.


def _to_slab(y, x):
    """Flatten a (y, x) pair to lane-dense (M, 128) slabs (source dtype kept).

    If the element count is not a multiple of 128, pad with y=0 / x=1 (the pad
    contributes exactly 0 to sum(y * log(x))).  Typical NCHW activation sizes
    are multiples of 128, so this fallback copy is rarely taken.
    """
    y = y.reshape(-1)
    x = x.reshape(-1)
    rem = y.shape[0] % _LANES
    if rem:
        pad = _LANES - rem
        y = jnp.pad(y, (0, pad))                      # pads with 0
        x = jnp.pad(x, (0, pad), constant_values=1)   # log(1) = 0
    m = y.shape[0] // _LANES
    return y.reshape(m, _LANES), x.reshape(m, _LANES)


def _block_rows(m, max_rows):
    # Either a full-height block (always legal) or a multiple-of-8 tile.
    return m if m <= max_rows else max_rows


def _tl_sums(y1s, x1s, y2s, x2s, max_block_rows):
    """Returns (sum(y1*log(x1)), sum(y2*log(x2))) from one fused pallas_call."""
    # Multi-block tiles must obey the (8, 128) layout rule; full-height blocks
    # (m <= max_rows) are exempt.
    max_rows = max(8, (max_block_rows // 8) * 8)

    m1, m2 = y1s.shape[0], y2s.shape[0]
    tm1 = _block_rows(m1, max_rows)
    tm2 = _block_rows(m2, max_rows)
    nb1 = pl.cdiv(m1, tm1)
    nb2 = pl.cdiv(m2, tm2)
    nsteps = max(nb1, nb2)

    # Leading "parallel" axis splits the row-block range (megacore balance on
    # v7x); the trailing "arbitrary" axis streams blocks within each split.
    n_splits = 2 if nsteps >= 2 else 1
    sps = pl.cdiv(nsteps, n_splits)     # steps per split

    tail1 = m1 % tm1                    # valid rows in the last block (0 = full)
    tail2 = m2 % tm2

    def kernel(y1_ref, x1_ref, y2_ref, x2_ref, o_ref, acc1_ref, acc2_ref):
        s = pl.program_id(0)            # split (parallel -> per-core on v7x)
        i = pl.program_id(1)            # step within the split (reduction axis)
        j = s * sps + i                 # global row-block index

        @pl.when(i == 0)
        def _init():
            acc1_ref[...] = jnp.zeros_like(acc1_ref)
            acc2_ref[...] = jnp.zeros_like(acc2_ref)

        def _accumulate(y_ref, x_ref, acc_ref, tm, nb, tail):
            def _unmasked():
                yv = y_ref[...].astype(jnp.float32)
                xv = x_ref[...].astype(jnp.float32)
                acc_ref[...] += (yv * jnp.log(xv)).sum(axis=0, keepdims=True)

            def _masked():
                # Last block only: mask the Pallas-padded rows BEFORE the log
                # (x -> 1, y -> 0) so no NaN/Inf is ever produced.
                yv = y_ref[...].astype(jnp.float32)
                xv = x_ref[...].astype(jnp.float32)
                rows = jax.lax.broadcasted_iota(jnp.int32, (tm, _LANES), 0)
                valid = rows < tail
                yv = jnp.where(valid, yv, 0.0)
                xv = jnp.where(valid, xv, 1.0)
                acc_ref[...] += (yv * jnp.log(xv)).sum(axis=0, keepdims=True)

            if tail == 0:
                pl.when(j < nb)(_unmasked)
            else:
                pl.when(j < nb - 1)(_unmasked)
                pl.when(j == nb - 1)(_masked)

        _accumulate(y1_ref, x1_ref, acc1_ref, tm1, nb1, tail1)
        _accumulate(y2_ref, x2_ref, acc2_ref, tm2, nb2, tail2)

        @pl.when(i == sps - 1)
        def _finish():
            # One cross-lane reduce per pair, once per split.
            o_ref[0, 0] = jnp.sum(acc1_ref[...])
            o_ref[0, 1] = jnp.sum(acc2_ref[...])

    # Block index maps: out-of-range steps of a (shorter) pair clamp to the
    # last block, so the block index stays constant and no redundant DMA is
    # issued while that pair is idle (the kernel masks those steps out).
    def idx1(s, i):
        return (jnp.minimum(s * sps + i, nb1 - 1), 0)

    def idx2(s, i):
        return (jnp.minimum(s * sps + i, nb2 - 1), 0)

    n_elems = x1s.size + x2s.size
    cost = pl.CostEstimate(
        flops=2 * n_elems,                      # mul + add per element
        transcendentals=n_elems,                # one log per x element
        bytes_accessed=(y1s.size * y1s.dtype.itemsize
                        + x1s.size * x1s.dtype.itemsize
                        + y2s.size * y2s.dtype.itemsize
                        + x2s.size * x2s.dtype.itemsize),
    )

    out = pl.pallas_call(
        kernel,
        out_shape=jax.ShapeDtypeStruct((n_splits, 2), jnp.float32),
        grid_spec=pltpu.PrefetchScalarGridSpec(
            num_scalar_prefetch=0,
            grid=(n_splits, sps),
            in_specs=[
                pl.BlockSpec((tm1, _LANES), idx1),
                pl.BlockSpec((tm1, _LANES), idx1),
                pl.BlockSpec((tm2, _LANES), idx2),
                pl.BlockSpec((tm2, _LANES), idx2),
            ],
            out_specs=pl.BlockSpec(
                (1, 2), lambda s, i: (s, 0), memory_space=pltpu.SMEM
            ),
            scratch_shapes=[
                pltpu.VMEM((1, _LANES), jnp.float32),   # pair-1 accumulator
                pltpu.VMEM((1, _LANES), jnp.float32),   # pair-2 accumulator
            ],
        ),
        compiler_params=pltpu.CompilerParams(
            dimension_semantics=("parallel", "arbitrary"),
        ),
        cost_estimate=cost,
    )(y1s, x1s, y2s, x2s)

    sums = jnp.sum(out, axis=0)       # add the per-split partial sums
    return sums[0], sums[1]


def tl_loss(y1, x1, y2, x2, *, max_block_rows=_MAX_BLOCK_ROWS):
    """CE(y1, x1) + CE(y2, x2) with CE(y, x) = -sum(log(x) * y) / (H * W)."""
    s1 = x1.shape[2] * x1.shape[3]
    s2 = x2.shape[2] * x2.shape[3]
    y1s, x1s = _to_slab(y1, x1)
    y2s, x2s = _to_slab(y2, x2)
    sum1, sum2 = _tl_sums(y1s, x1s, y2s, x2s, max_block_rows)
    return -sum1 / jnp.float32(s1) - sum2 / jnp.float32(s2)


def _ref_tl(y1, x1, y2, x2):
    s1 = x1.shape[2] * x1.shape[3]
    s2 = x2.shape[2] * x2.shape[3]
    return (-jnp.sum(jnp.log(x1) * y1) / s1) + (-jnp.sum(jnp.log(x2) * y2) / s2)


if __name__ == "__main__":
    key = jax.random.PRNGKey(0)
    k1, k2, k3, k4 = jax.random.split(key, 4)

    B, C, H, W = 2, 4, 16, 16  # NCHW
    # x must be positive (log); y is a target/weight tensor.
    x1 = jax.random.uniform(k1, (B, C, H, W), jnp.float32, minval=0.1, maxval=1.0)
    x2 = jax.random.uniform(k2, (B, C, H, W), jnp.float32, minval=0.1, maxval=1.0)
    y1 = jax.random.uniform(k3, (B, C, H, W), jnp.float32)
    y2 = jax.random.uniform(k4, (B, C, H, W), jnp.float32)

    out = tl_loss(y1, x1, y2, x2)
    jax.block_until_ready(out)
    ref = _ref_tl(y1, x1, y2, x2)
    assert jnp.allclose(out, ref, rtol=1e-4, atol=1e-4), (out, ref)

    # Extra check: odd / different shapes per pair with a tiny block size to
    # force multi-block streaming, last-block-only masking, the 128-pad
    # fallback, the 2-way row-block split and the clamped idle steps of the
    # shorter pair.
    ka, kb, kc, kd = jax.random.split(jax.random.PRNGKey(1), 4)
    xa = jax.random.uniform(ka, (2, 4, 16, 18), jnp.float32, minval=0.1, maxval=1.0)
    ya = jax.random.uniform(kb, (2, 4, 16, 18), jnp.float32)
    xb = jax.random.uniform(kc, (1, 3, 7, 11), jnp.float32, minval=0.1, maxval=1.0)
    yb = jax.random.uniform(kd, (1, 3, 7, 11), jnp.float32)
    out2 = tl_loss(ya, xa, yb, xb, max_block_rows=8)
    jax.block_until_ready(out2)
    ref2 = _ref_tl(ya, xa, yb, xb)
    assert jnp.allclose(out2, ref2, rtol=1e-4, atol=1e-4), (out2, ref2)

    print("KERNEL_OK")
</pallas_src>

<mosaic_0001>
module attributes {stable_mosaic.version = 11 : i64} {
  func.func @kernel(%arg0: i32, %arg1: i32, %arg2: memref<16x128xf32, #tpu.memory_space<vmem>>, %arg3: memref<16x128xf32, #tpu.memory_space<vmem>>, %arg4: memref<16x128xf32, #tpu.memory_space<vmem>>, %arg5: memref<16x128xf32, #tpu.memory_space<vmem>>, %arg6: memref<1x2xf32, #tpu.memory_space<smem>>, %arg7: memref<1x128xf32, #tpu.memory_space<vmem>>, %arg8: memref<1x128xf32, #tpu.memory_space<vmem>>) attributes {dimension_semantics = [#tpu.dimension_semantics<parallel>, #tpu.dimension_semantics<arbitrary>], iteration_bounds = array<i64: 1, 1>, scalar_prefetch = 0 : i64, scratch_operands = 2 : i64, tpu.core_type = #tpu.core_type<tc>, window_params = [{transform_indices = @transform_0, window_bounds = array<i64: 16, 128>}, {transform_indices = @transform_1, window_bounds = array<i64: 16, 128>}, {transform_indices = @transform_2, window_bounds = array<i64: 16, 128>}, {transform_indices = @transform_3, window_bounds = array<i64: 16, 128>}, {transform_indices = @transform_4, window_bounds = array<i64: 1, 2>}]} {
    %c1_i32 = arith.constant 1 : i32
    %0 = arith.muli %arg0, %c1_i32 : i32
    %1 = arith.addi %0, %arg1 : i32
    %c0_i32 = arith.constant 0 : i32
    %2 = arith.cmpi eq, %arg1, %c0_i32 : i32
    %3 = arith.extui %2 : i1 to i32
    %c0_i32_0 = arith.constant 0 : i32
    %4 = arith.cmpi ne, %3, %c0_i32_0 : i32
    scf.if %4 {
      %cst = arith.constant 0.000000e+00 : f32
      %14 = vector.broadcast %cst : f32 to vector<1x128xf32>
      %c0 = arith.constant 0 : index
      %c0_7 = arith.constant 0 : index
      %15 = vector.load %arg7[%c0, %c0_7] : memref<1x128xf32, #tpu.memory_space<vmem>>, vector<1x128xf32>
      tpu.vector_store %arg7[%c0, %c0_7], %14 {strides = array<i32>} : memref<1x128xf32, #tpu.memory_space<vmem>>, vector<1x128xf32>,
      %cst_8 = arith.constant 0.000000e+00 : f32
      %16 = vector.broadcast %cst_8 : f32 to vector<1x128xf32>
      %c0_9 = arith.constant 0 : index
      %c0_10 = arith.constant 0 : index
      %17 = vector.load %arg8[%c0_9, %c0_10] : memref<1x128xf32, #tpu.memory_space<vmem>>, vector<1x128xf32>
      tpu.vector_store %arg8[%c0_9, %c0_10], %16 {strides = array<i32>} : memref<1x128xf32, #tpu.memory_space<vmem>>, vector<1x128xf32>,
    } else {
    }
    %c1_i32_1 = arith.constant 1 : i32
    %5 = arith.cmpi slt, %1, %c1_i32_1 : i32
    %6 = arith.extui %5 : i1 to i32
    %c0_i32_2 = arith.constant 0 : i32
    %7 = arith.cmpi ne, %6, %c0_i32_2 : i32
    scf.if %7 {
      %c0 = arith.constant 0 : index
      %c0_7 = arith.constant 0 : index
      %14 = vector.load %arg2[%c0, %c0_7] : memref<16x128xf32, #tpu.memory_space<vmem>>, vector<16x128xf32>
      %c0_8 = arith.constant 0 : index
      %c0_9 = arith.constant 0 : index
      %15 = vector.load %arg3[%c0_8, %c0_9] : memref<16x128xf32, #tpu.memory_space<vmem>>, vector<16x128xf32>
      %c0_10 = arith.constant 0 : index
      %c0_11 = arith.constant 0 : index
      %16 = vector.load %arg7[%c0_10, %c0_11] : memref<1x128xf32, #tpu.memory_space<vmem>>, vector<1x128xf32>
      %17 = math.log %15 : vector<16x128xf32>
      %18 = arith.mulf %14, %17 : vector<16x128xf32>
      %cst = arith.constant dense<0.000000e+00> : vector<128xf32>
      %19 = vector.multi_reduction <add>, %18, %cst [0] : vector<16x128xf32> to vector<128xf32>
      %20 = vector.shape_cast %19 : vector<128xf32> to vector<1x128xf32>
      %21 = arith.addf %16, %20 : vector<1x128xf32>
      %c0_12 = arith.constant 0 : index
      %c0_13 = arith.constant 0 : index
      %22 = vector.load %arg7[%c0_12, %c0_13] : memref<1x128xf32, #tpu.memory_space<vmem>>, vector<1x128xf32>
      tpu.vector_store %arg7[%c0_12, %c0_13], %21 {strides = array<i32>} : memref<1x128xf32, #tpu.memory_space<vmem>>, vector<1x128xf32>,
    } else {
    }
    %c1_i32_3 = arith.constant 1 : i32
    %8 = arith.cmpi slt, %1, %c1_i32_3 : i32
    %9 = arith.extui %8 : i1 to i32
    %c0_i32_4 = arith.constant 0 : i32
    %10 = arith.cmpi ne, %9, %c0_i32_4 : i32
    scf.if %10 {
      %c0 = arith.constant 0 : index
      %c0_7 = arith.constant 0 : index
      %14 = vector.load %arg4[%c0, %c0_7] : memref<16x128xf32, #tpu.memory_space<vmem>>, vector<16x128xf32>
      %c0_8 = arith.constant 0 : index
      %c0_9 = arith.constant 0 : index
      %15 = vector.load %arg5[%c0_8, %c0_9] : memref<16x128xf32, #tpu.memory_space<vmem>>, vector<16x128xf32>
      %c0_10 = arith.constant 0 : index
      %c0_11 = arith.constant 0 : index
      %16 = vector.load %arg8[%c0_10, %c0_11] : memref<1x128xf32, #tpu.memory_space<vmem>>, vector<1x128xf32>
      %17 = math.log %15 : vector<16x128xf32>
      %18 = arith.mulf %14, %17 : vector<16x128xf32>
      %cst = arith.constant dense<0.000000e+00> : vector<128xf32>
      %19 = vector.multi_reduction <add>, %18, %cst [0] : vector<16x128xf32> to vector<128xf32>
      %20 = vector.shape_cast %19 : vector<128xf32> to vector<1x128xf32>
      %21 = arith.addf %16, %20 : vector<1x128xf32>
      %c0_12 = arith.constant 0 : index
      %c0_13 = arith.constant 0 : index
      %22 = vector.load %arg8[%c0_12, %c0_13] : memref<1x128xf32, #tpu.memory_space<vmem>>, vector<1x128xf32>
      tpu.vector_store %arg8[%c0_12, %c0_13], %21 {strides = array<i32>} : memref<1x128xf32, #tpu.memory_space<vmem>>, vector<1x128xf32>,
    } else {
    }
    %c0_i32_5 = arith.constant 0 : i32
    %11 = arith.cmpi eq, %arg1, %c0_i32_5 : i32
    %12 = arith.extui %11 : i1 to i32
    %c0_i32_6 = arith.constant 0 : i32
    %13 = arith.cmpi ne, %12, %c0_i32_6 : i32
    scf.if %13 {
      %c0 = arith.constant 0 : index
      %c0_7 = arith.constant 0 : index
      %14 = vector.load %arg7[%c0, %c0_7] : memref<1x128xf32, #tpu.memory_space<vmem>>, vector<1x128xf32>
      %15 = vector.shape_cast %14 : vector<1x128xf32> to vector<1x1x128xf32>
      %cst = arith.constant dense<0.000000e+00> : vector<1xf32>
      %16 = vector.multi_reduction <add>, %15, %cst [1, 2] : vector<1x1x128xf32> to vector<1xf32>
      %17 = vector.shape_cast %16 : vector<1xf32> to vector<1x1x1xf32>
      %18 = vector.extract %17[0, 0, 0] : f32 from vector<1x1x1xf32>
      %c0_8 = arith.constant 0 : index
      %c0_9 = arith.constant 0 : index
      %19 = memref.load %arg6[%c0_8, %c0_9] : memref<1x2xf32, #tpu.memory_space<smem>>
      memref.store %18, %arg6[%c0_8, %c0_9] : memref<1x2xf32, #tpu.memory_space<smem>>
      %c0_10 = arith.constant 0 : index
      %c0_11 = arith.constant 0 : index
      %20 = vector.load %arg8[%c0_10, %c0_11] : memref<1x128xf32, #tpu.memory_space<vmem>>, vector<1x128xf32>
      %21 = vector.shape_cast %20 : vector<1x128xf32> to vector<1x1x128xf32>
      %cst_12 = arith.constant dense<0.000000e+00> : vector<1xf32>
      %22 = vector.multi_reduction <add>, %21, %cst_12 [1, 2] : vector<1x1x128xf32> to vector<1xf32>
      %23 = vector.shape_cast %22 : vector<1xf32> to vector<1x1x1xf32>
      %24 = vector.extract %23[0, 0, 0] : f32 from vector<1x1x1xf32>
      %c0_13 = arith.constant 0 : index
      %c1 = arith.constant 1 : index
      %25 = memref.load %arg6[%c0_13, %c1] : memref<1x2xf32, #tpu.memory_space<smem>>
      memref.store %24, %arg6[%c0_13, %c1] : memref<1x2xf32, #tpu.memory_space<smem>>
    } else {
    }
    return
  }
  func.func @transform_0(%arg0: i32, %arg1: i32) -> (i32, i32) {
    %c1_i32 = arith.constant 1 : i32
    %0 = arith.muli %arg0, %c1_i32 : i32
    %1 = arith.addi %0, %arg1 : i32
    %c0_i32 = arith.constant 0 : i32
    %2 = arith.minsi %1, %c0_i32 : i32
    %c0_i32_0 = arith.constant 0 : i32
    %c0_i32_1 = arith.constant 0 : i32
    return %2, %c0_i32_0 : i32, i32
  }
  func.func @transform_1(%arg0: i32, %arg1: i32) -> (i32, i32) {
    %c1_i32 = arith.constant 1 : i32
    %0 = arith.muli %arg0, %c1_i32 : i32
    %1 = arith.addi %0, %arg1 : i32
    %c0_i32 = arith.constant 0 : i32
    %2 = arith.minsi %1, %c0_i32 : i32
    %c0_i32_0 = arith.constant 0 : i32
    %c0_i32_1 = arith.constant 0 : i32
    return %2, %c0_i32_0 : i32, i32
  }
  func.func @transform_2(%arg0: i32, %arg1: i32) -> (i32, i32) {
    %c1_i32 = arith.constant 1 : i32
    %0 = arith.muli %arg0, %c1_i32 : i32
    %1 = arith.addi %0, %arg1 : i32
    %c0_i32 = arith.constant 0 : i32
    %2 = arith.minsi %1, %c0_i32 : i32
    %c0_i32_0 = arith.constant 0 : i32
    %c0_i32_1 = arith.constant 0 : i32
    return %2, %c0_i32_0 : i32, i32
  }
  func.func @transform_3(%arg0: i32, %arg1: i32) -> (i32, i32) {
    %c1_i32 = arith.constant 1 : i32
    %0 = arith.muli %arg0, %c1_i32 : i32
    %1 = arith.addi %0, %arg1 : i32
    %c0_i32 = arith.constant 0 : i32
    %2 = arith.minsi %1, %c0_i32 : i32
    %c0_i32_0 = arith.constant 0 : i32
    %c0_i32_1 = arith.constant 0 : i32
    return %2, %c0_i32_0 : i32, i32
  }
  func.func @transform_4(%arg0: i32, %arg1: i32) -> (i32, i32) {
    %c0_i32 = arith.constant 0 : i32
    %c0_i32_0 = arith.constant 0 : i32
    return %arg0, %c0_i32 : i32, i32
  }
}

</mosaic_0001>

<llo_original>
// kernel: tpu_custom_call.1
$region0: #{tpu_custom_call.1}
  #allocation0 [shape = 'u32[]', space=smem, size = 0x4, offset = 0x4, fixed_abs, tag = 'smem constant byte address 0x4 - core index']
  #allocation1 [shape = 'u32[72,128]{1,0:T(1,128)}', space=vmem, size = 0x9000, scoped, tag = 'internal scratch']
  #allocation2 [shape = 'f32[1,128]{1,0:T(1,128)}', space=vmem, size = 0x200, scoped, tag = 'scratch operand']
  #allocation3 [shape = 'f32[1,128]{1,0:T(1,128)}', space=vmem, size = 0x200, scoped, tag = 'scratch operand']
  %s0 = inlined_call_operand.hbm [shape: f32[16,128], index: 0, kind: input, shape index: {}]
  %s1 = inlined_call_operand.hbm [shape: f32[16,128], index: 1, kind: input, shape index: {}]
  %s2 = inlined_call_operand.hbm [shape: f32[16,128], index: 2, kind: input, shape index: {}]
  %s3 = inlined_call_operand.hbm [shape: f32[16,128], index: 3, kind: input, shape index: {}]
  %s4 = inlined_call_operand.hbm [shape: f32[1,2], index: 4, kind: output, shape index: {}]
  %s5 = sld [smem:[#allocation0]]
  $region54: #{tpu_custom_call.1} parent=0
    _
  %s7 = ssub.s32 1, %s5
  %s8 = scalar_select 0, %s7, %s5
  $region1: #{tpu_custom_call.1} parent=0
    #allocation4 [shape = 'u8[8192]{0}', space=vmem, size = 0x2000, scoped, tag = 'input window, operand 0, single buffered']
    #allocation5 [shape = 's32[1]{0}', space=sflag, size = 0x4, scoped, tag = 'scoped memory for tpu_custom_call.1']
    #allocation6 [shape = 's32[1]{0}', space=sflag, size = 0x4, scoped, tag = 'scoped memory for tpu_custom_call.1']
    #allocation7 [shape = 'u8[8192]{0}', space=vmem, size = 0x2000, scoped, tag = 'input window, operand 1, single buffered']
    #allocation8 [shape = 's32[1]{0}', space=sflag, size = 0x4, scoped, tag = 'scoped memory for tpu_custom_call.1']
    #allocation9 [shape = 'u8[8192]{0}', space=vmem, size = 0x2000, scoped, tag = 'input window, operand 2, single buffered']
    #allocation10 [shape = 'u8[8192]{0}', space=vmem, size = 0x2000, scoped, tag = 'input window, operand 3, single buffered']
    #allocation11 [shape = 's32[1]{0}', space=sflag, size = 0x4, scoped, tag = 'scoped memory for tpu_custom_call.1']
    #allocation12 [shape = 'u8[512]{0}', space=smem, size = 0x200, scoped, tag = 'output window, operand 0, single buffered']
    %9 = vsyncpa [#allocation5], 0
    %10 = vsyncpa [#allocation8], 0
    %11 = vsyncpa [#allocation11], 0
    %12 = vsyncpa [#allocation6], 0
    // Predicated region
    $region2: #{tpu_custom_call.1} parent=1 // pred_check
      _
    $region3: #{tpu_custom_call.1} parent=1 // pred_check_branch
      %14 = sbr.rel (0) target = $region5
    $region4: #{tpu_custom_call.1} parent=1 // pred_region
      %s15 = sadd.s32 0, 0
      %p16 = scmp.lt.s32.totalorder %s15, 0
      %s17 = scalar_select %p16, %s15, 0
      %s18 = smul.u32 2, %s17
      %20 = vsyncadd [#allocation5], 0
      %s21 = smul.addr %s18, 8
      %s22 = scalar_lea.hbm %s0, %s21
      %s23 = sshll.u32 %s22, 4
      %s24 = int_to_ptr.hbm [resolvable:$true] %s23
      %s25 = sshll.u32 [#allocation4], 4
      %s26 = int_to_ptr.vmem [resolvable:$true] %s25
      %31 = dma.hbm_to_vmem [thread:$0]  %s24, 256, %s26, [#allocation5], 128, 128, 8
    $region5: #{tpu_custom_call.1} parent=1 // pred_fallthru
      _
    // Predicated region
    $region6: #{tpu_custom_call.1} parent=1 // pred_check
      _
    $region7: #{tpu_custom_call.1} parent=1 // pred_check_branch
      %33 = sbr.rel (0) target = $region9
    $region8: #{tpu_custom_call.1} parent=1 // pred_region
      %s34 = sadd.s32 0, 0
      %p35 = scmp.lt.s32.totalorder %s34, 0
      %s36 = scalar_select %p35, %s34, 0
      %s37 = smul.u32 2, %s36
      %39 = vsyncadd [#allocation8], 0
      %s40 = smul.addr %s37, 8
      %s41 = scalar_lea.hbm %s1, %s40
      %s42 = sshll.u32 %s41, 4
      %s43 = int_to_ptr.hbm [resolvable:$true] %s42
      %s44 = sshll.u32 [#allocation7], 4
      %s45 = int_to_ptr.vmem [resolvable:$true] %s44
      %50 = dma.hbm_to_vmem [thread:$0]  %s43, 256, %s45, [#allocation8], 128, 128, 8
    $region9: #{tpu_custom_call.1} parent=1 // pred_fallthru
      _
    // Predicated region
    $region10: #{tpu_custom_call.1} parent=1 // pred_check
      _
    $region11: #{tpu_custom_call.1} parent=1 // pred_check_branch
      %52 = sbr.rel (0) target = $region13
    $region12: #{tpu_custom_call.1} parent=1 // pred_region
      %s53 = sadd.s32 0, 0
      %p54 = scmp.lt.s32.totalorder %s53, 0
      %s55 = scalar_select %p54, %s53, 0
      %s56 = smul.u32 2, %s55
      %58 = vsyncadd [#allocation8], 0
      %s59 = smul.addr %s56, 8
      %s60 = scalar_lea.hbm %s2, %s59
      %s61 = sshll.u32 %s60, 4
      %s62 = int_to_ptr.hbm [resolvable:$true] %s61
      %s63 = sshll.u32 [#allocation9], 4
      %s64 = int_to_ptr.vmem [resolvable:$true] %s63
      %69 = dma.hbm_to_vmem [thread:$0]  %s62, 256, %s64, [#allocation8], 128, 128, 8
    $region13: #{tpu_custom_call.1} parent=1 // pred_fallthru
      _
    // Predicated region
    $region14: #{tpu_custom_call.1} parent=1 // pred_check
      _
    $region15: #{tpu_custom_call.1} parent=1 // pred_check_branch
      %71 = sbr.rel (0) target = $region17
    $region16: #{tpu_custom_call.1} parent=1 // pred_region
      %s72 = sadd.s32 0, 0
      %p73 = scmp.lt.s32.totalorder %s72, 0
      %s74 = scalar_select %p73, %s72, 0
      %s75 = smul.u32 2, %s74
      %77 = vsyncadd [#allocation11], 0
      %s78 = smul.addr %s75, 8
      %s79 = scalar_lea.hbm %s3, %s78
      %s80 = sshll.u32 %s79, 4
      %s81 = int_to_ptr.hbm [resolvable:$true] %s80
      %s82 = sshll.u32 [#allocation10], 4
      %s83 = int_to_ptr.vmem [resolvable:$true] %s82
      %88 = dma.hbm_to_vmem [thread:$0]  %s81, 256, %s83, [#allocation11], 128, 128, 8
    $region17: #{tpu_custom_call.1} parent=1 // pred_fallthru
      _
    // Predicated region
    $region18: #{tpu_custom_call.1} parent=1 // pred_check
      _
    $region19: #{tpu_custom_call.1} parent=1 // pred_check_branch
      %90 = sbr.rel (0) target = $region21
    $region20: #{tpu_custom_call.1} parent=1 // pred_region
      %92 = dma.done [#allocation5], 256
    $region21: #{tpu_custom_call.1} parent=1 // pred_fallthru
      _
    // Predicated region
    $region22: #{tpu_custom_call.1} parent=1 // pred_check
      _
    $region23: #{tpu_custom_call.1} parent=1 // pred_check_branch
      %94 = sbr.rel (0) target = $region25
    $region24: #{tpu_custom_call.1} parent=1 // pred_region
      %96 = dma.done [#allocation8], 256
    $region25: #{tpu_custom_call.1} parent=1 // pred_fallthru
      _
    // Predicated region
    $region26: #{tpu_custom_call.1} parent=1 // pred_check
      _
    $region27: #{tpu_custom_call.1} parent=1 // pred_check_branch
      %98 = sbr.rel (0) target = $region29
    $region28: #{tpu_custom_call.1} parent=1 // pred_region
      %100 = dma.done [#allocation8], 256
    $region29: #{tpu_custom_call.1} parent=1 // pred_fallthru
      _
    // Predicated region
    $region30: #{tpu_custom_call.1} parent=1 // pred_check
      _
    $region31: #{tpu_custom_call.1} parent=1 // pred_check_branch
      %102 = sbr.rel (0) target = $region33
    $region32: #{tpu_custom_call.1} parent=1 // pred_region
      %104 = dma.done [#allocation11], 256
    $region33: #{tpu_custom_call.1} parent=1 // pred_fallthru
      _
    %s105 = sadd.s32 0, 0
    %p106 = scmp.lt.s32.totalorder %s105, 0
    %s107 = scalar_select %p106, %s105, 0
    %s108 = smul.u32 2, %s107
    %s109 = sadd.s32 0, 0
    %p110 = scmp.lt.s32.totalorder %s109, 0
    %s111 = scalar_select %p110, %s109, 0
    %s112 = smul.u32 2, %s111
    %s113 = sadd.s32 0, 0
    %p114 = scmp.lt.s32.totalorder %s113, 0
    %s115 = scalar_select %p114, %s113, 0
    %s116 = smul.u32 2, %s115
    %s117 = sadd.s32 0, 0
    %p118 = scmp.lt.s32.totalorder %s117, 0
    %s119 = scalar_select %p118, %s117, 0
    %s120 = smul.u32 2, %s119
    %s121 = sadd.s32 0, 0
    %p122 = scmp.eq.s32.totalorder 0, 0
    // Predicated region
    $region34: #{tpu_custom_call.1} parent=1 // pred_check
      %p123 = pneg %p122
    $region35: #{tpu_custom_call.1} parent=1 // pred_check_branch
      %125 = sbr.rel (%p123) target = $region37
    $region36: #{tpu_custom_call.1} parent=1 // pred_region
      %126 = vst [vmem:[#allocation2] sm:$0x1] 0.0
      %127 = vst [vmem:[#allocation3] sm:$0x1] 0.0
    $region37: #{tpu_custom_call.1} parent=1 // pred_fallthru
      _
    %p128 = scmp.lt.s32.totalorder %s121, 1
    // Predicated region
    $region38: #{tpu_custom_call.1} parent=1 // pred_check
      %p129 = pneg %p128
    $region39: #{tpu_custom_call.1} parent=1 // pred_check_branch
      %131 = sbr.rel (%p129) target = $region41
    $region40: #{tpu_custom_call.1} parent=1 // pred_region
      %v132 = vld [vmem:[#allocation4] sm:$0xff]
      %v133 = vld [vmem:[#allocation4 + $0x8] sm:$0xff]
      %v134 = vld [vmem:[#allocation7] sm:$0xff]
      %v135 = vld [vmem:[#allocation7 + $0x8] sm:$0xff]
      %v136 = vld [vmem:[#allocation2] sm:$0x1]
      %v137 = vlog2.pop %v134
      %v138 = vmul.f32 %v137, 0.6931472
      %v139 = vlog2.pop %v135
      %v140 = vmul.f32 %v139, 0.6931472
      %v141 = vmul.f32 %v132, %v138
      %v142 = vmul.f32 %v133, %v140
      %v143 = vadd.f32 %v141, %v142
      %v144 = vrot.slane %v143, 4
      %v145 = vadd.f32 %v143, %v144
      %v146 = vrot.slane %v145, 2
      %v147 = vadd.f32 %v145, %v146
      %v148 = vrot.slane %v147, 1
      %v149 = vadd.f32 %v147, %v148
      %v150 = vadd.f32 %v136, %v149
      %151 = vst [vmem:[#allocation2] sm:$0x1] %v150
      %v152 = vld [vmem:[#allocation9] sm:$0xff]
      %v153 = vld [vmem:[#allocation9 + $0x8] sm:$0xff]
      %v154 = vld [vmem:[#allocation10] sm:$0xff]
      %v155 = vld [vmem:[#allocation10 + $0x8] sm:$0xff]
      %v156 = vld [vmem:[#allocation3] sm:$0x1]
      %v157 = vlog2.pop %v154
      %v158 = vmul.f32 %v157, 0.6931472
      %v159 = vlog2.pop %v155
      %v160 = vmul.f32 %v159, 0.6931472
      %v161 = vmul.f32 %v152, %v158
      %v162 = vmul.f32 %v153, %v160
      %v163 = vadd.f32 %v161, %v162
      %v164 = vrot.slane %v163, 4
      %v165 = vadd.f32 %v163, %v164
      %v166 = vrot.slane %v165, 2
      %v167 = vadd.f32 %v165, %v166
      %v168 = vrot.slane %v167, 1
      %v169 = vadd.f32 %v167, %v168
      %v170 = vadd.f32 %v156, %v169
      %171 = vst [vmem:[#allocation3] sm:$0x1] %v170
    $region41: #{tpu_custom_call.1} parent=1 // pred_fallthru
      _
    // Predicated region
    $region42: #{tpu_custom_call.1} parent=1 // pred_check
      %p172 = pneg %p122
    $region43: #{tpu_custom_call.1} parent=1 // pred_check_branch
      %174 = sbr.rel (%p172) target = $region45
    $region44: #{tpu_custom_call.1} parent=1 // pred_region
      %v175 = vld [vmem:[#allocation2] sm:$0x1]
      %vm176 = vcmask 1040384
      %v177 = vsel %vm176, %v175, 0.0
      %178 = vadd.xlane.f32.xlu0 %v177
      %v179 = vpop.xlane.xlu0 %178
      %v180 = vrot.slane %v179, 4
      %v181 = vadd.f32 %v179, %v180
      %v182 = vrot.slane %v181, 2
      %v183 = vadd.f32 %v181, %v182
      %v184 = vrot.slane %v183, 1
      %v185 = vadd.f32 %v183, %v184
      %s186 = vtos %v185
      %s187 = scalar_lea.smem [#allocation12], 0
      %188 = sst [smem:[%s187]] %s186
      %v189 = vld [vmem:[#allocation3] sm:$0x1]
      %v190 = vsel %vm176, %v189, 0.0
      %191 = vadd.xlane.f32.xlu0 %v190
      %v192 = vpop.xlane.xlu0 %191
      %v193 = vrot.slane %v192, 4
      %v194 = vadd.f32 %v192, %v193
      %v195 = vrot.slane %v194, 2
      %v196 = vadd.f32 %v194, %v195
      %v197 = vrot.slane %v196, 1
      %v198 = vadd.f32 %v196, %v197
      %s199 = vtos %v198
      %s200 = scalar_lea.smem [#allocation12], 1
      %201 = sst [smem:[%s200]] %s199
    $region45: #{tpu_custom_call.1} parent=1 // pred_fallthru
      _
    // Predicated region
    $region46: #{tpu_custom_call.1} parent=1 // pred_check
      _
    $region47: #{tpu_custom_call.1} parent=1 // pred_check_branch
      %203 = sbr.rel (0) target = $region49
    $region48: #{tpu_custom_call.1} parent=1 // pred_region
      %205 = vsyncadd [#allocation6], 0
      %s207 = sshll.u32 %s4, 4
      %s208 = int_to_ptr.hbm [resolvable:$true] %s207
      %210 = dma.smem_to_hbm [#allocation12], 16, %s208, [#allocation6]
    $region49: #{tpu_custom_call.1} parent=1 // pred_fallthru
      _
    // Predicated region
    $region50: #{tpu_custom_call.1} parent=1 // pred_check
      _
    $region51: #{tpu_custom_call.1} parent=1 // pred_check_branch
      %212 = sbr.rel (0) target = $region53
    $region52: #{tpu_custom_call.1} parent=1 // pred_region
      %214 = dma.done [#allocation6], 16
    $region53: #{tpu_custom_call.1} parent=1 // pred_fallthru
      _
    %215 = sfence
    %216 = vsyncpa [#allocation5], 1
    %217 = vsyncpa [#allocation8], 1
    %218 = vsyncpa [#allocation11], 1
    %219 = vsyncpa [#allocation6], 1

</llo_original>
